<compile_context>
chip_gen: v7x
topology: tpu7x:2x2x1
jax: 0.10.0
libtpu: 0.0.40
codegen_flags: <defaults>
</compile_context>

<pallas_src>
import functools

import jax
import jax.numpy as jnp
from jax import lax
from jax.experimental import pallas as pl
from jax.experimental.pallas import tpu as pltpu

_LANE = 128
_SLAB = 128       # in-kernel Ny slab width (lanes) for streaming P consumption
_MAX_TNY = 1024   # cap per-grid-step Ny tile (<= 8 unrolled slabs)


def _round_up(x, m):
    return (x + m - 1) // m * m


def _tpu_vmem_capacity_bytes():
    try:
        return int(pltpu.get_tpu_info().vmem_capacity_bytes)
    except Exception:  # not on TPU / API unavailable: assume smallest (v7x, 64 MiB)
        return 64 * 1024 * 1024


def _budgets():
    """(per-step tile budget, vmem_limit cap) in bytes, generation-aware."""
    cap = _tpu_vmem_capacity_bytes()
    if cap <= 64 * 1024 * 1024:            # v7x-class: 64 MiB VMEM per TensorCore
        return 24 * 1024 * 1024, 48 * 1024 * 1024
    return 64 * 1024 * 1024, 100 * 1024 * 1024   # v5e / v6e: 128 MiB VMEM


def _per_step_vmem(tb, nx, tny, kp):
    """Approximate per-grid-step VMEM footprint (double buffers + lane padding)."""
    lanes_t = _round_up(tny, _LANE)
    ya = 2 * tb * kp * lanes_t * 4                 # RHS tile, double-buffered
    xat = 2 * tb * nx * _LANE * 4                  # LHS tile (K lane-padded to 128)
    slab = min(lanes_t, _SLAB)
    p_tmp = 2 * tb * nx * slab * 4                 # headroom for a spilled P slab
    mini = tb * nx * _LANE * 4                     # running-min scratch (lane-padded)
    return ya + xat + p_tmp + mini


def _pick_tile_ny(nx, ny, kp, budget):
    """Largest TNy that divides Ny, is a multiple of 128, and fits the budget."""
    if ny % _LANE != 0:
        # Small / ragged Ny: a single tile covering all of Ny (block == full dim).
        # TODO(synk): pad ragged Ny to a multiple of 128 with +inf sentinels (and
        # add an Nx grid axis) if such shapes ever exceed the VMEM budget.
        return ny
    hi = min(ny, _MAX_TNY)
    for t in range(hi, _LANE - 1, -_LANE):
        if ny % t == 0 and _per_step_vmem(1, nx, t, kp) <= budget:
            return t
    # TODO(synk): tile Nx as an extra grid axis if even TNy=128 exceeds the budget.
    return _LANE


def _pick_tile_b(b, nx, tny, nj, kp, budget):
    """Batch several small point clouds per grid step to amortize step overhead."""
    if nj > 1:
        return 1   # streaming large Ny: keep the resident working set small
    # Keep at least two batch-grid steps so the "parallel" axis can shard across
    # v7x's two TensorCores; otherwise grow tb until the VMEM budget bites.
    cap = 1 if b < 2 else b // 2
    for cand in range(cap, 0, -1):
        if b % cand == 0 and _per_step_vmem(cand, nx, tny, kp) <= budget:
            return cand
    return 1


def _vmem_limit_bytes(tb, nx, tny, kp, limit_cap):
    need = _per_step_vmem(tb, nx, tny, kp) + tb * 8 * _LANE * 4 + (2 << 20)
    return int(min(max(2 * need, 32 * 1024 * 1024), limit_cap))


def _chamfer_kernel(xat_ref, ya_ref, o_ref, mini_ref, *, slab):
    """One (batch-block, Ny-tile) grid step.

    xat_ref:  (TB, Nx, KP)  augmented gts,   cols = [-2*x ; ||x||^2 ; 1 ; 0-pad]
    ya_ref:   (TB, KP, TNy) augmented preds, rows = [  y  ;    1    ; ||y||^2 ; 0-pad]
    o_ref:    (TB, 1, 1)    per-batch loss accumulator (resident over Ny tiles)
    mini_ref: (TB, Nx, 1)   running min_j P across Ny tiles (loss_2)
    """
    j = pl.program_id(1)
    nj = pl.num_programs(1)

    @pl.when(j == 0)
    def _init():
        o_ref[...] = jnp.zeros_like(o_ref)
        mini_ref[...] = jnp.full(mini_ref.shape, jnp.inf, mini_ref.dtype)

    xat = xat_ref[...]                 # resident across the Ny axis
    tny = ya_ref.shape[2]
    n_slabs = tny // slab
    assert n_slabs * slab == tny, (tny, slab)

    loc_sum = None                     # (TB, 1, 1)  loss_1 partial for this tile
    loc_min = None                     # (TB, Nx, 1) loss_2 partial for this tile
    for s in range(n_slabs):           # static unroll; each slab of P is consumed
        y_slab = ya_ref[:, :, pl.ds(s * slab, slab)]       # immediately (no full
        p = lax.dot_general(                               # Nx*TNy temp in VMEM)
            xat, y_slab,
            dimension_numbers=(((2,), (1,)), ((0,), (0,))),
            precision=lax.Precision.HIGHEST,
            preferred_element_type=jnp.float32,
        )                               # (TB, Nx, slab)
        # loss_1: min over gts points (axis 1) is complete within this tile.
        s_j = jnp.sum(jnp.min(p, axis=1, keepdims=True), axis=2, keepdims=True)
        # loss_2: per-gts-point min over this slab's preds (lane reduce, XLU).
        m_i = jnp.min(p, axis=2, keepdims=True)
        loc_sum = s_j if loc_sum is None else loc_sum + s_j
        loc_min = m_i if loc_min is None else jnp.minimum(loc_min, m_i)

    # Single accumulator / scratch read-modify-write per grid step (not per slab).
    o_ref[...] += loc_sum
    mini_ref[...] = jnp.minimum(mini_ref[...], loc_min)

    @pl.when(j == nj - 1)
    def _finalize():
        o_ref[...] += jnp.sum(mini_ref[...], axis=1, keepdims=True)


def chamfer_loss(preds, gts, *, tile_ny=None, tile_b=None):
    """Chamfer loss matching ChamferLoss.forward(preds, gts). Returns f32 scalar."""
    b, ny, d = preds.shape
    bg, nx, dg = gts.shape
    assert b == bg and d == dg, (preds.shape, gts.shape)

    f32 = jnp.float32
    kp = _round_up(d + 2, 8)

    x = gts.astype(f32)                               # (B, Nx, D)
    y = preds.astype(f32)                             # (B, Ny, D)
    rx = jnp.sum(x * x, axis=-1, keepdims=True)       # (B, Nx, 1)
    ry = jnp.sum(y * y, axis=-1, keepdims=True)       # (B, Ny, 1)

    # Augmented operands (layout plumbing, O(B*N*D)): one in-kernel MXU
    # contraction over K = KP yields P = rx + ry - 2*<x,y> directly.
    # LHS is already in M x K form (no in-kernel transpose); the streamed RHS
    # stays lane-dense with Ny on the 128-lane axis.
    pad_x = jnp.zeros((b, nx, kp - d - 2), f32)
    xat = jnp.concatenate([-2.0 * x, rx, jnp.ones_like(rx), pad_x], axis=-1)   # (B,Nx,KP)
    yt = jnp.swapaxes(y, 1, 2)                        # (B, D, Ny)
    ryt = jnp.swapaxes(ry, 1, 2)                      # (B, 1, Ny)
    pad_y = jnp.zeros((b, kp - d - 2, ny), f32)
    ya = jnp.concatenate([yt, jnp.ones_like(ryt), ryt, pad_y], axis=1)          # (B,KP,Ny)

    budget, limit_cap = _budgets()
    tny = tile_ny if tile_ny is not None else _pick_tile_ny(nx, ny, kp, budget)
    assert ny % tny == 0, (ny, tny)
    nj = ny // tny
    tb = tile_b if tile_b is not None else _pick_tile_b(b, nx, tny, nj, kp, budget)
    assert b % tb == 0, (b, tb)
    nb = b // tb

    slab = _SLAB if (tny % _SLAB == 0 and tny > _SLAB) else tny

    flops = 2 * b * nx * ny * kp + 4 * b * nx * ny
    bytes_accessed = (xat.size + ya.size + b) * 4

    kernel = functools.partial(_chamfer_kernel, slab=slab)
    per_batch = pl.pallas_call(
        kernel,
        out_shape=jax.ShapeDtypeStruct((b, 1, 1), f32),
        grid_spec=pltpu.PrefetchScalarGridSpec(
            num_scalar_prefetch=0,
            grid=(nb, nj),
            in_specs=[
                pl.BlockSpec((tb, nx, kp), lambda bi, ji: (bi, 0, 0)),    # gts aug (resident)
                pl.BlockSpec((tb, kp, tny), lambda bi, ji: (bi, 0, ji)),  # preds aug (streamed)
            ],
            out_specs=pl.BlockSpec((tb, 1, 1), lambda bi, ji: (bi, 0, 0)),
            scratch_shapes=[pltpu.VMEM((tb, nx, 1), f32)],
        ),
        compiler_params=pltpu.CompilerParams(
            dimension_semantics=("parallel", "arbitrary"),
            vmem_limit_bytes=_vmem_limit_bytes(tb, nx, tny, kp, limit_cap),
        ),
        cost_estimate=pl.CostEstimate(
            flops=int(flops), transcendentals=0, bytes_accessed=int(bytes_accessed)
        ),
    )(xat, ya)

    return jnp.sum(per_batch)


def _chamfer_loss_ref(preds, gts):
    # Pure-JAX reference mirroring the PyTorch code, for sanity checking.
    x = gts.astype(jnp.float32)
    y = preds.astype(jnp.float32)
    zz = jnp.einsum("bnd,bmd->bnm", x, y, precision=jax.lax.Precision.HIGHEST)
    rx = jnp.sum(x * x, axis=-1)[:, :, None]
    ry = jnp.sum(y * y, axis=-1)[:, None, :]
    p = rx + ry - 2.0 * zz
    return jnp.sum(jnp.min(p, axis=1)) + jnp.sum(jnp.min(p, axis=2))


if __name__ == "__main__":
    key = jax.random.PRNGKey(0)

    # Case 1: small point clouds (module-scale shapes); single Ny tile.
    k1, k2 = jax.random.split(key)
    B, N, D = 2, 16, 3
    preds = jax.random.normal(k1, (B, N, D), dtype=jnp.float32)
    gts = jax.random.normal(k2, (B, N, D), dtype=jnp.float32)
    loss = jax.jit(chamfer_loss)(preds, gts)
    jax.block_until_ready(loss)
    ref = _chamfer_loss_ref(preds, gts)
    assert jnp.allclose(loss, ref, rtol=1e-3, atol=1e-3), (loss, ref)

    # Case 2: asymmetric Nx != Ny with forced Ny tiling (exercises the running-min
    # accumulation across multiple Ny grid steps).
    k3, k4 = jax.random.split(k1)
    preds2 = jax.random.normal(k3, (2, 384, 3), dtype=jnp.float32)
    gts2 = jax.random.normal(k4, (2, 256, 3), dtype=jnp.float32)
    loss2 = jax.jit(functools.partial(chamfer_loss, tile_ny=128))(preds2, gts2)
    jax.block_until_ready(loss2)
    ref2 = _chamfer_loss_ref(preds2, gts2)
    assert jnp.allclose(loss2, ref2, rtol=1e-3, atol=1e-3), (loss2, ref2)

    # Case 3: Ny tile larger than one slab (exercises the in-kernel slab loop).
    k5, k6 = jax.random.split(k2)
    preds3 = jax.random.normal(k5, (2, 512, 3), dtype=jnp.float32)
    gts3 = jax.random.normal(k6, (2, 256, 3), dtype=jnp.float32)
    loss3 = jax.jit(chamfer_loss)(preds3, gts3)
    jax.block_until_ready(loss3)
    ref3 = _chamfer_loss_ref(preds3, gts3)
    assert jnp.allclose(loss3, ref3, rtol=1e-3, atol=1e-3), (loss3, ref3)

    print("KERNEL_OK")
</pallas_src>

<mosaic_0001>
module attributes {stable_mosaic.version = 11 : i64} {
  func.func @_chamfer_kernel(%arg0: i32, %arg1: i32, %arg2: memref<1x16x8xf32, #tpu.memory_space<vmem>>, %arg3: memref<1x8x16xf32, #tpu.memory_space<vmem>>, %arg4: memref<1x1x1xf32, #tpu.memory_space<vmem>>, %arg5: memref<1x16x1xf32, #tpu.memory_space<vmem>>) attributes {dimension_semantics = [#tpu.dimension_semantics<parallel>, #tpu.dimension_semantics<arbitrary>], iteration_bounds = array<i64: 2, 1>, scalar_prefetch = 0 : i64, scratch_operands = 1 : i64, tpu.core_type = #tpu.core_type<tc>, window_params = [{transform_indices = @transform_0, window_bounds = array<i64: 1, 16, 8>}, {transform_indices = @transform_1, window_bounds = array<i64: 1, 8, 16>}, {transform_indices = @transform_2, window_bounds = array<i64: 1, 1, 1>}]} {
    %c0_i32 = arith.constant 0 : i32
    %0 = arith.cmpi eq, %arg1, %c0_i32 : i32
    %1 = arith.extui %0 : i1 to i32
    %c0_i32_0 = arith.constant 0 : i32
    %2 = arith.cmpi ne, %1, %c0_i32_0 : i32
    scf.if %2 {
      %cst_23 = arith.constant 0.000000e+00 : f32
      %21 = vector.broadcast %cst_23 : f32 to vector<1x1x1xf32>
      %c0_24 = arith.constant 0 : index
      %c0_25 = arith.constant 0 : index
      %c0_26 = arith.constant 0 : index
      %22 = vector.load %arg4[%c0_24, %c0_25, %c0_26] : memref<1x1x1xf32, #tpu.memory_space<vmem>>, vector<1x1x1xf32>
      tpu.vector_store %arg4[%c0_24, %c0_25, %c0_26], %21 {strides = array<i32>} : memref<1x1x1xf32, #tpu.memory_space<vmem>>, vector<1x1x1xf32>,
      %cst_27 = arith.constant 0x7F800000 : f32
      %23 = vector.broadcast %cst_27 : f32 to vector<1x16x1xf32>
      %c0_28 = arith.constant 0 : index
      %c0_29 = arith.constant 0 : index
      %c0_30 = arith.constant 0 : index
      %24 = vector.load %arg5[%c0_28, %c0_29, %c0_30] : memref<1x16x1xf32, #tpu.memory_space<vmem>>, vector<1x16x1xf32>
      tpu.vector_store %arg5[%c0_28, %c0_29, %c0_30], %23 {strides = array<i32>} : memref<1x16x1xf32, #tpu.memory_space<vmem>>, vector<1x16x1xf32>,
    } else {
    }
    %c0 = arith.constant 0 : index
    %c0_1 = arith.constant 0 : index
    %c0_2 = arith.constant 0 : index
    %3 = vector.load %arg2[%c0, %c0_1, %c0_2] : memref<1x16x8xf32, #tpu.memory_space<vmem>>, vector<1x16x8xf32>
    %c0_3 = arith.constant 0 : index
    %c0_4 = arith.constant 0 : index
    %c0_5 = arith.constant 0 : index
    %4 = vector.load %arg3[%c0_3, %c0_4, %c0_5] : memref<1x8x16xf32, #tpu.memory_space<vmem>>, vector<1x8x16xf32>
    %cst = arith.constant dense<0.000000e+00> : vector<1x16x16xf32>
    %5 = tpu.matmul %3, %4, %cst {dimension_numbers = #tpu.dot_dimension_numbers<[2], [1], [1], [2], [0, 0, 0, 1, 1, 2], [0], [0]>, precision = #tpu.contract_precision<fp32>} : vector<1x16x8xf32>, vector<1x8x16xf32>, vector<1x16x16xf32> -> vector<1x16x16xf32>
    %cst_6 = arith.constant dense<0x7F800000> : vector<1x16xf32>
    %6 = vector.multi_reduction <minimumf>, %5, %cst_6 [1] : vector<1x16x16xf32> to vector<1x16xf32>
    %7 = vector.shape_cast %6 : vector<1x16xf32> to vector<1x1x16xf32>
    %cst_7 = arith.constant dense<0.000000e+00> : vector<1x1xf32>
    %8 = vector.multi_reduction <add>, %7, %cst_7 [2] : vector<1x1x16xf32> to vector<1x1xf32>
    %9 = vector.shape_cast %8 : vector<1x1xf32> to vector<1x1x1xf32>
    %cst_8 = arith.constant dense<0x7F800000> : vector<1x16xf32>
    %10 = vector.multi_reduction <minimumf>, %5, %cst_8 [2] : vector<1x16x16xf32> to vector<1x16xf32>
    %11 = vector.shape_cast %10 : vector<1x16xf32> to vector<1x16x1xf32>
    %c0_9 = arith.constant 0 : index
    %c0_10 = arith.constant 0 : index
    %c0_11 = arith.constant 0 : index
    %12 = vector.load %arg4[%c0_9, %c0_10, %c0_11] : memref<1x1x1xf32, #tpu.memory_space<vmem>>, vector<1x1x1xf32>
    %13 = arith.addf %12, %9 : vector<1x1x1xf32>
    %c0_12 = arith.constant 0 : index
    %c0_13 = arith.constant 0 : index
    %c0_14 = arith.constant 0 : index
    %14 = vector.load %arg4[%c0_12, %c0_13, %c0_14] : memref<1x1x1xf32, #tpu.memory_space<vmem>>, vector<1x1x1xf32>
    tpu.vector_store %arg4[%c0_12, %c0_13, %c0_14], %13 {strides = array<i32>} : memref<1x1x1xf32, #tpu.memory_space<vmem>>, vector<1x1x1xf32>,
    %c0_15 = arith.constant 0 : index
    %c0_16 = arith.constant 0 : index
    %c0_17 = arith.constant 0 : index
    %15 = vector.load %arg5[%c0_15, %c0_16, %c0_17] : memref<1x16x1xf32, #tpu.memory_space<vmem>>, vector<1x16x1xf32>
    %16 = arith.minimumf %15, %11 : vector<1x16x1xf32>
    %c0_18 = arith.constant 0 : index
    %c0_19 = arith.constant 0 : index
    %c0_20 = arith.constant 0 : index
    %17 = vector.load %arg5[%c0_18, %c0_19, %c0_20] : memref<1x16x1xf32, #tpu.memory_space<vmem>>, vector<1x16x1xf32>
    tpu.vector_store %arg5[%c0_18, %c0_19, %c0_20], %16 {strides = array<i32>} : memref<1x16x1xf32, #tpu.memory_space<vmem>>, vector<1x16x1xf32>,
    %c0_i32_21 = arith.constant 0 : i32
    %18 = arith.cmpi eq, %arg1, %c0_i32_21 : i32
    %19 = arith.extui %18 : i1 to i32
    %c0_i32_22 = arith.constant 0 : i32
    %20 = arith.cmpi ne, %19, %c0_i32_22 : i32
    scf.if %20 {
      %c0_23 = arith.constant 0 : index
      %c0_24 = arith.constant 0 : index
      %c0_25 = arith.constant 0 : index
      %21 = vector.load %arg4[%c0_23, %c0_24, %c0_25] : memref<1x1x1xf32, #tpu.memory_space<vmem>>, vector<1x1x1xf32>
      %c0_26 = arith.constant 0 : index
      %c0_27 = arith.constant 0 : index
      %c0_28 = arith.constant 0 : index
      %22 = vector.load %arg5[%c0_26, %c0_27, %c0_28] : memref<1x16x1xf32, #tpu.memory_space<vmem>>, vector<1x16x1xf32>
      %cst_29 = arith.constant dense<0.000000e+00> : vector<1x1xf32>
      %23 = vector.multi_reduction <add>, %22, %cst_29 [1] : vector<1x16x1xf32> to vector<1x1xf32>
      %24 = vector.shape_cast %23 : vector<1x1xf32> to vector<1x1x1xf32>
      %25 = arith.addf %21, %24 : vector<1x1x1xf32>
      %c0_30 = arith.constant 0 : index
      %c0_31 = arith.constant 0 : index
      %c0_32 = arith.constant 0 : index
      %26 = vector.load %arg4[%c0_30, %c0_31, %c0_32] : memref<1x1x1xf32, #tpu.memory_space<vmem>>, vector<1x1x1xf32>
      tpu.vector_store %arg4[%c0_30, %c0_31, %c0_32], %25 {strides = array<i32>} : memref<1x1x1xf32, #tpu.memory_space<vmem>>, vector<1x1x1xf32>,
    } else {
    }
    return
  }
  func.func @transform_0(%arg0: i32, %arg1: i32) -> (i32, i32, i32) {
    %c0_i32 = arith.constant 0 : i32
    %c0_i32_0 = arith.constant 0 : i32
    %c0_i32_1 = arith.constant 0 : i32
    return %arg0, %c0_i32, %c0_i32_0 : i32, i32, i32
  }
  func.func @transform_1(%arg0: i32, %arg1: i32) -> (i32, i32, i32) {
    %c0_i32 = arith.constant 0 : i32
    %c0_i32_0 = arith.constant 0 : i32
    return %arg0, %c0_i32, %arg1 : i32, i32, i32
  }
  func.func @transform_2(%arg0: i32, %arg1: i32) -> (i32, i32, i32) {
    %c0_i32 = arith.constant 0 : i32
    %c0_i32_0 = arith.constant 0 : i32
    %c0_i32_1 = arith.constant 0 : i32
    return %arg0, %c0_i32, %c0_i32_0 : i32, i32, i32
  }
}

</mosaic_0001>

<llo_original>
// kernel: chamfer_loss.1
$region0: #{chamfer_loss.1}
  #allocation0 [shape = 'u32[]', space=smem, size = 0x4, offset = 0x4, fixed_abs, tag = 'smem constant byte address 0x4 - core index']
  #allocation1 [shape = 'u32[144,128]{1,0:T(1,128)}', space=vmem, size = 0x12000, scoped, tag = 'internal scratch']
  #allocation2 [shape = 'f32[1,16,1]{2,1,0:T(8,128)}', space=vmem, size = 0x2000, scoped, tag = 'scratch operand']
  %s0 = inlined_call_operand.vmem [shape: f32[2,16,8], index: 0, kind: input, shape index: {}]
  %s1 = inlined_call_operand.vmem [shape: f32[2,8,16], index: 1, kind: input, shape index: {}]
  %s2 = inlined_call_operand.vmem [shape: f32[2,1,1], index: 2, kind: output, shape index: {}]
  %s3 = sld [smem:[#allocation0]]
  $region49: #{chamfer_loss.1} parent=0
    _
  %s5 = ssub.s32 1, %s3
  %s6 = scalar_select 0, %s5, %s3
  loop: start=0, step=1, limit=4
  $region2: #{chamfer_loss.1} parent=0 // loop_pre_header
    _
  $region3: #{chamfer_loss.1} parent=0 // loop_header
    %s8 = sphi 0, %s12
    %p9 = scmp.ge.s32.totalorder %s8, 4
    %s15 = sphi 0, %s27
    %s16 = sphi 0, %s23
    %s17 = sphi 0, %s15
    %s18 = sphi 0, %s16
    %s19 = sphi 0, %s17
    %s20 = sphi 0, %s18
    %s30 = sphi 0, %s32
    %s33 = sphi 0, %s30
    %s34 = sphi 0, %s33
    %s50 = sphi 0, %s34
    %s58 = sphi 0, %s60
    %s61 = sphi 0, %s58
    %s62 = sphi 0, %s61
    %s78 = sphi 0, %s62
    %s84 = sphi 0, %s86
    %s87 = sphi 0, %s84
    %s88 = sphi 0, %s87
    %s104 = sphi 0, %s88
  $region4: #{chamfer_loss.1} parent=0 // loop_header_branch
    %11 = sbr.rel (%p9) target = $region8
  $region5: #{chamfer_loss.1} parent=0 // loop_body
    %s13 = ssub.s32 %s8, 1
    %s14 = ssub.s32 %s8, 2
    %s21 = sadd.s32 1, %s16
    %p22 = scmp.ge.s32.totalorder %s21, 1
    %s23 = scalar_select %p22, 0, %s21
    %s24 = sadd.s32 1, %s15
    %s25 = scalar_select %p22, %s24, %s15
    %p26 = scmp.ge.s32.totalorder %s25, 2
    %s27 = scalar_select %p26, 0, %s25
    %s28 = ssub.s32 %s15, %s27
    %p29 = scmp.eq.s32.totalorder %s28, 0
    %s31 = sadd.s32 %s30, 1
    %s32 = scalar_select %p29, %s30, %s31
    %p35 = pneg %p29
    %p36 = scmp.eq.s32.totalorder %s8, 1
    %p37 = por %p35, %p36
    %p38 = scmp.ne.s32.totalorder %s30, %s33
    %p39 = scmp.eq.s32.totalorder %s8, 0
    %p40 = por %p38, %p39
    %p41 = scmp.ne.s32.totalorder %s30, %s33
    %p42 = scmp.eq.s32.totalorder %s13, 1
    %p43 = por %p41, %p42
    %p44 = scmp.ne.s32.totalorder %s33, %s34
    %p45 = scmp.eq.s32.totalorder %s13, 0
    %p46 = por %p44, %p45
    %p47 = scmp.ne.s32.totalorder %s33, %s34
    %p48 = scmp.eq.s32.totalorder %s14, 1
    %p49 = por %p47, %p48
    %p51 = scmp.ne.s32.totalorder %s34, %s50
    %p52 = scmp.eq.s32.totalorder %s14, 0
    %p53 = por %p51, %p52
    %s54 = ssub.s32 %s15, %s27
    %s55 = ssub.s32 %s16, %s23
    %s56 = sor.u32 %s54, %s55
    %p57 = scmp.eq.s32.totalorder %s56, 0
    %s59 = sadd.s32 %s58, 1
    %s60 = scalar_select %p57, %s58, %s59
    %p63 = pneg %p57
    %p64 = scmp.eq.s32.totalorder %s8, 1
    %p65 = por %p63, %p64
    %p66 = scmp.ne.s32.totalorder %s58, %s61
    %p67 = scmp.eq.s32.totalorder %s8, 0
    %p68 = por %p66, %p67
    %p69 = scmp.ne.s32.totalorder %s58, %s61
    %p70 = scmp.eq.s32.totalorder %s13, 1
    %p71 = por %p69, %p70
    %p72 = scmp.ne.s32.totalorder %s61, %s62
    %p73 = scmp.eq.s32.totalorder %s13, 0
    %p74 = por %p72, %p73
    %p75 = scmp.ne.s32.totalorder %s61, %s62
    %p76 = scmp.eq.s32.totalorder %s14, 1
    %p77 = por %p75, %p76
    %p79 = scmp.ne.s32.totalorder %s62, %s78
    %p80 = scmp.eq.s32.totalorder %s14, 0
    %p81 = por %p79, %p80
    %s82 = ssub.s32 %s15, %s27
    %p83 = scmp.eq.s32.totalorder %s82, 0
    %s85 = sadd.s32 %s84, 1
    %s86 = scalar_select %p83, %s84, %s85
    %p89 = pneg %p83
    %p90 = scmp.eq.s32.totalorder %s8, 1
    %p91 = por %p89, %p90
    %p92 = scmp.ne.s32.totalorder %s84, %s87
    %p93 = scmp.eq.s32.totalorder %s8, 0
    %p94 = por %p92, %p93
    %p95 = scmp.ne.s32.totalorder %s84, %s87
    %p96 = scmp.eq.s32.totalorder %s13, 1
    %p97 = por %p95, %p96
    %p98 = scmp.ne.s32.totalorder %s87, %s88
    %p99 = scmp.eq.s32.totalorder %s13, 0
    %p100 = por %p98, %p99
    %p101 = scmp.ne.s32.totalorder %s87, %s88
    %p102 = scmp.eq.s32.totalorder %s14, 1
    %p103 = por %p101, %p102
    %p105 = scmp.ne.s32.totalorder %s88, %s104
    %p106 = scmp.eq.s32.totalorder %s14, 0
    %p107 = por %p105, %p106
    %p108 = scmp.le.s32.totalorder 1, %s8
    %p109 = scmp.lt.s32.totalorder %s8, 3
    %p110 = pnand %p108, %p109
    %p111 = pneg %p110
    // Predicated region
    $region9: #{chamfer_loss.1} parent=5 // pred_check
      _
    $region10: #{chamfer_loss.1} parent=5 // pred_check_branch
      %113 = sbr.rel (%p110) target = $region12
    $region11: #{chamfer_loss.1} parent=5 // pred_region
      %s114 = ssub.s32 %s8, 1
    $region12: #{chamfer_loss.1} parent=5 // pred_fallthru
      _
    %p115 = scmp.lt.s32.totalorder %s8, 2
    // Predicated region
    $region13: #{chamfer_loss.1} parent=5 // pred_check
      %p116 = pneg %p115
    $region14: #{chamfer_loss.1} parent=5 // pred_check_branch
      %118 = sbr.rel (%p116) target = $region16
    $region15: #{chamfer_loss.1} parent=5 // pred_region
      // Predicated region
      $region17: #{chamfer_loss.1} parent=15 // pred_check
        %p119 = pneg %p40
      $region18: #{chamfer_loss.1} parent=15 // pred_check_branch
        %121 = sbr.rel (%p119) target = $region20
      $region19: #{chamfer_loss.1} parent=15 // pred_region
        %p122 = scmp.lt.s32.totalorder %s15, 1
        %s123 = scalar_select %p122, %s15, 1
        %s124 = smul.addr %s123, 2
        %s125 = smul.addr %s124, 8
        %s126 = scalar_lea.vmem %s0, %s125
      $region20: #{chamfer_loss.1} parent=15 // pred_fallthru
        _
      // Predicated region
      $region21: #{chamfer_loss.1} parent=15 // pred_check
        %p127 = pneg %p68
      $region22: #{chamfer_loss.1} parent=15 // pred_check_branch
        %129 = sbr.rel (%p127) target = $region24
      $region23: #{chamfer_loss.1} parent=15 // pred_region
        %p130 = scmp.lt.s32.totalorder %s15, 1
        %s131 = scalar_select %p130, %s15, 1
        %p132 = scmp.lt.s32.totalorder %s16, 0
        %s133 = scalar_select %p132, %s16, 0
        %s134 = sadd.s32 %s133, %s131
        %s135 = smul.addr %s134, 8
        %s136 = scalar_lea.vmem %s1, %s135
      $region24: #{chamfer_loss.1} parent=15 // pred_fallthru
        _
    $region16: #{chamfer_loss.1} parent=5 // pred_fallthru
      _
    %p137 = scmp.le.s32.totalorder 1, %s8
    %p138 = scmp.lt.s32.totalorder %s8, 3
    %p139 = pnand %p137, %p138
    %p140 = pneg %p139
    // Predicated region
    $region25: #{chamfer_loss.1} parent=5 // pred_check
      _
    $region26: #{chamfer_loss.1} parent=5 // pred_check_branch
      %142 = sbr.rel (%p139) target = $region28
    $region27: #{chamfer_loss.1} parent=5 // pred_region
      %s143 = ssub.s32 %s8, 1
      %p144 = scmp.lt.s32.totalorder %s17, 1
      %s145 = scalar_select %p144, %s17, 1
      %s146 = smul.addr %s145, 2
      %s147 = smul.addr %s146, 8
      %s148 = scalar_lea.vmem %s0, %s147
      %p149 = pneg %p46
      %p150 = pneg %p43
      %p151 = scmp.lt.s32.totalorder %s17, 1
      %s152 = scalar_select %p151, %s17, 1
      %p153 = scmp.lt.s32.totalorder %s18, 0
      %s154 = scalar_select %p153, %s18, 0
      %s155 = sadd.s32 %s154, %s152
      %s156 = smul.addr %s155, 8
      %s157 = scalar_lea.vmem %s1, %s156
      %p158 = pneg %p74
      %p159 = pneg %p71
      %p160 = pneg %p100
      %p161 = pneg %p97
      %p162 = scmp.lt.s32.totalorder %s17, 1
      %s163 = scalar_select %p162, %s17, 1
      %s164 = scalar_lea.vmem %s2, %s163
      %p165 = scmp.lt.s32.totalorder %s17, 1
      %s166 = scalar_select %p165, %s17, 1
      %s167 = smul.addr %s166, 2
      %s168 = smul.addr %s167, 8
      %s169 = scalar_lea.vmem %s0, %s168
      %p170 = scmp.lt.s32.totalorder %s17, 1
      %s171 = scalar_select %p170, %s17, 1
      %p172 = scmp.lt.s32.totalorder %s18, 0
      %s173 = scalar_select %p172, %s18, 0
      %s174 = sadd.s32 %s173, %s171
      %s175 = smul.addr %s174, 8
      %s176 = scalar_lea.vmem %s1, %s175
      %p177 = scmp.lt.s32.totalorder %s17, 1
      %s178 = scalar_select %p177, %s17, 1
      %s179 = scalar_lea.vmem %s2, %s178
      %p180 = scmp.eq.s32.totalorder %s18, 0
      // Predicated region
      $region29: #{chamfer_loss.1} parent=27 // pred_check
        %p181 = pneg %p180
      $region30: #{chamfer_loss.1} parent=27 // pred_check_branch
        %183 = sbr.rel (%p181) target = $region32
      $region31: #{chamfer_loss.1} parent=27 // pred_region
        %vm184 = vcmask 0
        %185 = vst.msk [vmem:[%s179] sm:$0x1] %vm184, 0.0
        %vm186 = vcmask 7168
        %187 = vst.msk [vmem:[#allocation2] sm:$0xff] %vm186, inf
        %188 = vst.msk [vmem:[#allocation2 + $0x8] sm:$0xff] %vm186, inf
      $region32: #{chamfer_loss.1} parent=27 // pred_fallthru
        _
      %v189 = vld [vmem:[%s169] sm:$0xff]
      %v190 = vld [vmem:[%s169 + $0x8] sm:$0xff]
      %v191 = vld [vmem:[%s176] sm:$0xff]
      %vm192 = vcmask 64512
      %v194 = vsel %vm192, %v189, 0
      %v197 = vsel %vm192, %v190, 0
      %199 = vmatprep.subr.mxu0 0.0
      %v200 = vand.u32 %v191, 4294901760
      %201 = vmatpush1.msra.mxu0 %v200
      %202 = vmatprep.subr.mxu0 0.0
      %203 = vmatpush1.msra.mxu0 0.0
      %204 = vmatprep.subr.mxu0 0.0
      %205 = vmatpush1.msra.mxu0 0.0
      %206 = vmatprep.subr.mxu0 0.0
      %207 = vmatpush1.msra.mxu0 0.0
      %208 = vmatprep.subr.mxu0 0.0
      %209 = vmatpush1.msra.mxu0 0.0
      %210 = vmatprep.subr.mxu0 0.0
      %211 = vmatpush1.msra.mxu0 0.0
      %212 = vmatprep.subr.mxu0 0.0
      %213 = vmatpush1.msra.mxu0 0.0
      %214 = vmatprep.subr.mxu0 0.0
      %215 = vmatpush1.msra.mxu0 0.0
      %216 = vmatprep.subr.mxu0 0.0
      %217 = vmatpush1.msra.mxu0 0.0
      %218 = vmatprep.subr.mxu0 0.0
      %219 = vmatpush1.msra.mxu0 0.0
      %220 = vmatprep.subr.mxu0 0.0
      %221 = vmatpush1.msra.mxu0 0.0
      %222 = vmatprep.subr.mxu0 0.0
      %223 = vmatpush1.msra.mxu0 0.0
      %224 = vmatprep.subr.mxu0 0.0
      %225 = vmatpush1.msra.mxu0 0.0
      %226 = vmatprep.subr.mxu0 0.0
      %227 = vmatpush1.msra.mxu0 0.0
      %228 = vmatprep.subr.mxu0 0.0
      %229 = vmatpush1.msra.mxu0 0.0
      %230 = vmatprep.subr.mxu0 0.0
      %231 = vmatpush1.msra.mxu0 0.0
      %232 = vmatprep.subr.mxu0 0.0
      %233 = vmatpush1.msra.mxu0 0.0
      %234 = vmatprep.subr.mxu0 0.0
      %235 = vmatpush1.msra.mxu0 0.0
      %236 = vmatprep.subr.mxu0 0.0
      %237 = vmatpush1.msra.mxu0 0.0
      %238 = vmatprep.subr.mxu0 0.0
      %239 = vmatpush1.msra.mxu0 0.0
      %240 = vmatprep.subr.mxu0 0.0
      %241 = vmatpush1.msra.mxu0 0.0
      %242 = vmatprep.subr.mxu0 0.0
      %243 = vmatpush1.msra.mxu0 0.0
      %244 = vmatprep.subr.mxu0 0.0
      %245 = vmatpush1.msra.mxu0 0.0
      %246 = vmatprep.subr.mxu0 0.0
      %247 = vmatpush1.msra.mxu0 0.0
      %248 = vmatprep.subr.mxu0 0.0
      %249 = vmatpush1.msra.mxu0 0.0
      %250 = vmatprep.subr.mxu0 0.0
      %251 = vmatpush1.msra.mxu0 0.0
      %252 = vmatprep.subr.mxu0 0.0
      %253 = vmatpush1.msra.mxu0 0.0
      %254 = vmatprep.subr.mxu0 0.0
      %255 = vmatpush1.msra.mxu0 0.0
      %256 = vmatprep.subr.mxu0 0.0
      %257 = vmatpush1.msra.mxu0 0.0
      %258 = vmatprep.subr.mxu0 0.0
      %259 = vmatpush1.msra.mxu0 0.0
      %260 = vmatprep.subr.mxu0 0.0
      %261 = vmatpush1.msra.mxu0 0.0
      %262 = vmatprep.subr.mxu0 0.0
      %263 = vmatpush1.msra.mxu0 0.0
      %264 = vmatprep.mubr.f32.mxu0 0.0
      %v265 = vand.u32 %v194, 4294901760
      %v266 = vsub.f32 %v194, %v265
      %v267 = vand.u32 %v266, 4294901760
      %v268 = vsub.f32 %v266, %v267
      %v269 = vand.u32 %v268, 4294901760
      %270 = vmatmul.mubr.f32.gmra.mrb[0].mxu0 %v269
      %v271 = vpop.f32.mrb[0].mxu0
      %v272 = vadd.f32 0.0, %v271
      %v273 = vpop.f32.mrb[0].mxu0
      %274 = vmatprep.mubr.f32.mxu0 0.0
      %v275 = vand.u32 %v197, 4294901760
      %v276 = vsub.f32 %v197, %v275
      %v277 = vand.u32 %v276, 4294901760
      %v278 = vsub.f32 %v276, %v277
      %v279 = vand.u32 %v278, 4294901760
      %280 = vmatmul.mubr.f32.gmra.mrb[0].mxu0 %v279
      %v281 = vpop.f32.mrb[0].mxu0
      %v282 = vadd.f32 0.0, %v281
      %v283 = vpop.f32.mrb[0].mxu0
      %284 = vdwg.mxu0
      %285 = vmatprep.subr.mxu0 0.0
      %v286 = vand.u32 %v191, 4294901760
      %v287 = vsub.f32 %v191, %v286
      %v288 = vand.u32 %v287, 4294901760
      %v289 = vsub.f32 %v287, %v288
      %v290 = vand.u32 %v289, 4294901760
      %291 = vmatpush1.msra.mxu0 %v290
      %292 = vmatprep.subr.mxu0 0.0
      %293 = vmatpush1.msra.mxu0 0.0
      %294 = vmatprep.subr.mxu0 0.0
      %295 = vmatpush1.msra.mxu0 0.0
      %296 = vmatprep.subr.mxu0 0.0
      %297 = vmatpush1.msra.mxu0 0.0
      %298 = vmatprep.subr.mxu0 0.0
      %299 = vmatpush1.msra.mxu0 0.0
      %300 = vmatprep.subr.mxu0 0.0
      %301 = vmatpush1.msra.mxu0 0.0
      %302 = vmatprep.subr.mxu0 0.0
      %303 = vmatpush1.msra.mxu0 0.0
      %304 = vmatprep.subr.mxu0 0.0
      %305 = vmatpush1.msra.mxu0 0.0
      %306 = vmatprep.subr.mxu0 0.0
      %307 = vmatpush1.msra.mxu0 0.0
      %308 = vmatprep.subr.mxu0 0.0
      %309 = vmatpush1.msra.mxu0 0.0
      %310 = vmatprep.subr.mxu0 0.0
      %311 = vmatpush1.msra.mxu0 0.0
      %312 = vmatprep.subr.mxu0 0.0
      %313 = vmatpush1.msra.mxu0 0.0
      %314 = vmatprep.subr.mxu0 0.0
      %315 = vmatpush1.msra.mxu0 0.0
      %316 = vmatprep.subr.mxu0 0.0
      %317 = vmatpush1.msra.mxu0 0.0
      %318 = vmatprep.subr.mxu0 0.0
      %319 = vmatpush1.msra.mxu0 0.0
      %320 = vmatprep.subr.mxu0 0.0
      %321 = vmatpush1.msra.mxu0 0.0
      %322 = vmatprep.subr.mxu0 0.0
      %323 = vmatpush1.msra.mxu0 0.0
      %324 = vmatprep.subr.mxu0 0.0
      %325 = vmatpush1.msra.mxu0 0.0
      %326 = vmatprep.subr.mxu0 0.0
      %327 = vmatpush1.msra.mxu0 0.0
      %328 = vmatprep.subr.mxu0 0.0
      %329 = vmatpush1.msra.mxu0 0.0
      %330 = vmatprep.subr.mxu0 0.0
      %331 = vmatpush1.msra.mxu0 0.0
      %332 = vmatprep.subr.mxu0 0.0
      %333 = vmatpush1.msra.mxu0 0.0
      %334 = vmatprep.subr.mxu0 0.0
      %335 = vmatpush1.msra.mxu0 0.0
      %336 = vmatprep.subr.mxu0 0.0
      %337 = vmatpush1.msra.mxu0 0.0
      %338 = vmatprep.subr.mxu0 0.0
      %339 = vmatpush1.msra.mxu0 0.0
      %340 = vmatprep.subr.mxu0 0.0
      %341 = vmatpush1.msra.mxu0 0.0
      %342 = vmatprep.subr.mxu0 0.0
      %343 = vmatpush1.msra.mxu0 0.0
      %344 = vmatprep.subr.mxu0 0.0
      %345 = vmatpush1.msra.mxu0 0.0
      %346 = vmatprep.subr.mxu0 0.0
      %347 = vmatpush1.msra.mxu0 0.0
      %348 = vmatprep.subr.mxu0 0.0
      %349 = vmatpush1.msra.mxu0 0.0
      %350 = vmatprep.subr.mxu0 0.0
      %351 = vmatpush1.msra.mxu0 0.0
      %352 = vmatprep.subr.mxu0 0.0
      %353 = vmatpush1.msra.mxu0 0.0
      %354 = vmatprep.mubr.f32.mxu0 0.0
      %v355 = vand.u32 %v194, 4294901760
      %356 = vmatmul.mubr.f32.gmra.mrb[0].mxu0 %v355
      %v357 = vpop.f32.mrb[0].mxu0
      %v358 = vadd.f32 %v272, %v357
      %v359 = vpop.f32.mrb[0].mxu0
      %360 = vmatprep.mubr.f32.mxu0 0.0
      %v361 = vand.u32 %v197, 4294901760
      %362 = vmatmul.mubr.f32.gmra.mrb[0].mxu0 %v361
      %v363 = vpop.f32.mrb[0].mxu0
      %v364 = vadd.f32 %v282, %v363
      %v365 = vpop.f32.mrb[0].mxu0
      %366 = vdwg.mxu0
      %367 = vmatprep.subr.mxu0 0.0
      %v368 = vand.u32 %v191, 4294901760
      %v369 = vsub.f32 %v191, %v368
      %370 = vmatpush1.msra.mxu0 %v369
      %371 = vmatprep.subr.mxu0 0.0
      %372 = vmatpush1.msra.mxu0 0.0
      %373 = vmatprep.subr.mxu0 0.0
      %374 = vmatpush1.msra.mxu0 0.0
      %375 = vmatprep.subr.mxu0 0.0
      %376 = vmatpush1.msra.mxu0 0.0
      %377 = vmatprep.subr.mxu0 0.0
      %378 = vmatpush1.msra.mxu0 0.0
      %379 = vmatprep.subr.mxu0 0.0
      %380 = vmatpush1.msra.mxu0 0.0
      %381 = vmatprep.subr.mxu0 0.0
      %382 = vmatpush1.msra.mxu0 0.0
      %383 = vmatprep.subr.mxu0 0.0
      %384 = vmatpush1.msra.mxu0 0.0
      %385 = vmatprep.subr.mxu0 0.0
      %386 = vmatpush1.msra.mxu0 0.0
      %387 = vmatprep.subr.mxu0 0.0
      %388 = vmatpush1.msra.mxu0 0.0
      %389 = vmatprep.subr.mxu0 0.0
      %390 = vmatpush1.msra.mxu0 0.0
      %391 = vmatprep.subr.mxu0 0.0
      %392 = vmatpush1.msra.mxu0 0.0
      %393 = vmatprep.subr.mxu0 0.0
      %394 = vmatpush1.msra.mxu0 0.0
      %395 = vmatprep.subr.mxu0 0.0
      %396 = vmatpush1.msra.mxu0 0.0
      %397 = vmatprep.subr.mxu0 0.0
      %398 = vmatpush1.msra.mxu0 0.0
      %399 = vmatprep.subr.mxu0 0.0
      %400 = vmatpush1.msra.mxu0 0.0
      %401 = vmatprep.subr.mxu0 0.0
      %402 = vmatpush1.msra.mxu0 0.0
      %403 = vmatprep.subr.mxu0 0.0
      %404 = vmatpush1.msra.mxu0 0.0
      %405 = vmatprep.subr.mxu0 0.0
      %406 = vmatpush1.msra.mxu0 0.0
      %407 = vmatprep.subr.mxu0 0.0
      %408 = vmatpush1.msra.mxu0 0.0
      %409 = vmatprep.subr.mxu0 0.0
      %410 = vmatpush1.msra.mxu0 0.0
      %411 = vmatprep.subr.mxu0 0.0
      %412 = vmatpush1.msra.mxu0 0.0
      %413 = vmatprep.subr.mxu0 0.0
      %414 = vmatpush1.msra.mxu0 0.0
      %415 = vmatprep.subr.mxu0 0.0
      %416 = vmatpush1.msra.mxu0 0.0
      %417 = vmatprep.subr.mxu0 0.0
      %418 = vmatpush1.msra.mxu0 0.0
      %419 = vmatprep.subr.mxu0 0.0
      %420 = vmatpush1.msra.mxu0 0.0
      %421 = vmatprep.subr.mxu0 0.0
      %422 = vmatpush1.msra.mxu0 0.0
      %423 = vmatprep.subr.mxu0 0.0
      %424 = vmatpush1.msra.mxu0 0.0
      %425 = vmatprep.subr.mxu0 0.0
      %426 = vmatpush1.msra.mxu0 0.0
      %427 = vmatprep.subr.mxu0 0.0
      %428 = vmatpush1.msra.mxu0 0.0
      %429 = vmatprep.subr.mxu0 0.0
      %430 = vmatpush1.msra.mxu0 0.0
      %431 = vmatprep.subr.mxu0 0.0
      %432 = vmatpush1.msra.mxu0 0.0
      %433 = vmatprep.mubr.f32.mxu0 0.0
      %v434 = vand.u32 %v194, 4294901760
      %v435 = vsub.f32 %v194, %v434
      %436 = vmatmul.mubr.f32.gmra.mrb[0].mxu0 %v435
      %v437 = vpop.f32.mrb[0].mxu0
      %v438 = vadd.f32 %v358, %v437
      %v439 = vpop.f32.mrb[0].mxu0
      %440 = vmatprep.mubr.f32.mxu0 0.0
      %v441 = vand.u32 %v197, 4294901760
      %v442 = vsub.f32 %v197, %v441
      %443 = vmatmul.mubr.f32.gmra.mrb[0].mxu0 %v442
      %v444 = vpop.f32.mrb[0].mxu0
      %v445 = vadd.f32 %v364, %v444
      %v446 = vpop.f32.mrb[0].mxu0
      %447 = vdwg.mxu0
      %448 = vmatprep.subr.mxu0 0.0
      %v449 = vand.u32 %v191, 4294901760
      %450 = vmatpush1.msra.mxu0 %v449
      %451 = vmatprep.subr.mxu0 0.0
      %452 = vmatpush1.msra.mxu0 0.0
      %453 = vmatprep.subr.mxu0 0.0
      %454 = vmatpush1.msra.mxu0 0.0
      %455 = vmatprep.subr.mxu0 0.0
      %456 = vmatpush1.msra.mxu0 0.0
      %457 = vmatprep.subr.mxu0 0.0
      %458 = vmatpush1.msra.mxu0 0.0
      %459 = vmatprep.subr.mxu0 0.0
      %460 = vmatpush1.msra.mxu0 0.0
      %461 = vmatprep.subr.mxu0 0.0
      %462 = vmatpush1.msra.mxu0 0.0
      %463 = vmatprep.subr.mxu0 0.0
      %464 = vmatpush1.msra.mxu0 0.0
      %465 = vmatprep.subr.mxu0 0.0
      %466 = vmatpush1.msra.mxu0 0.0
      %467 = vmatprep.subr.mxu0 0.0
      %468 = vmatpush1.msra.mxu0 0.0
      %469 = vmatprep.subr.mxu0 0.0
      %470 = vmatpush1.msra.mxu0 0.0
      %471 = vmatprep.subr.mxu0 0.0
      %472 = vmatpush1.msra.mxu0 0.0
      %473 = vmatprep.subr.mxu0 0.0
      %474 = vmatpush1.msra.mxu0 0.0
      %475 = vmatprep.subr.mxu0 0.0
      %476 = vmatpush1.msra.mxu0 0.0
      %477 = vmatprep.subr.mxu0 0.0
      %478 = vmatpush1.msra.mxu0 0.0
      %479 = vmatprep.subr.mxu0 0.0
      %480 = vmatpush1.msra.mxu0 0.0
      %481 = vmatprep.subr.mxu0 0.0
      %482 = vmatpush1.msra.mxu0 0.0
      %483 = vmatprep.subr.mxu0 0.0
      %484 = vmatpush1.msra.mxu0 0.0
      %485 = vmatprep.subr.mxu0 0.0
      %486 = vmatpush1.msra.mxu0 0.0
      %487 = vmatprep.subr.mxu0 0.0
      %488 = vmatpush1.msra.mxu0 0.0
      %489 = vmatprep.subr.mxu0 0.0
      %490 = vmatpush1.msra.mxu0 0.0
      %491 = vmatprep.subr.mxu0 0.0
      %492 = vmatpush1.msra.mxu0 0.0
      %493 = vmatprep.subr.mxu0 0.0
      %494 = vmatpush1.msra.mxu0 0.0
      %495 = vmatprep.subr.mxu0 0.0
      %496 = vmatpush1.msra.mxu0 0.0
      %497 = vmatprep.subr.mxu0 0.0
      %498 = vmatpush1.msra.mxu0 0.0
      %499 = vmatprep.subr.mxu0 0.0
      %500 = vmatpush1.msra.mxu0 0.0
      %501 = vmatprep.subr.mxu0 0.0
      %502 = vmatpush1.msra.mxu0 0.0
      %503 = vmatprep.subr.mxu0 0.0
      %504 = vmatpush1.msra.mxu0 0.0
      %505 = vmatprep.subr.mxu0 0.0
      %506 = vmatpush1.msra.mxu0 0.0
      %507 = vmatprep.subr.mxu0 0.0
      %508 = vmatpush1.msra.mxu0 0.0
      %509 = vmatprep.subr.mxu0 0.0
      %510 = vmatpush1.msra.mxu0 0.0
      %511 = vmatprep.subr.mxu0 0.0
      %512 = vmatpush1.msra.mxu0 0.0
      %513 = vmatprep.mubr.f32.mxu0 0.0
      %v514 = vand.u32 %v194, 4294901760
      %v515 = vsub.f32 %v194, %v514
      %v516 = vand.u32 %v515, 4294901760
      %517 = vmatmul.mubr.f32.gmra.mrb[0].mxu0 %v516
      %v518 = vpop.f32.mrb[0].mxu0
      %v519 = vadd.f32 %v438, %v518
      %v520 = vpop.f32.mrb[0].mxu0
      %521 = vmatprep.mubr.f32.mxu0 0.0
      %v522 = vand.u32 %v197, 4294901760
      %v523 = vsub.f32 %v197, %v522
      %v524 = vand.u32 %v523, 4294901760
      %525 = vmatmul.mubr.f32.gmra.mrb[0].mxu0 %v524
      %v526 = vpop.f32.mrb[0].mxu0
      %v527 = vadd.f32 %v445, %v526
      %v528 = vpop.f32.mrb[0].mxu0
      %529 = vdwg.mxu0
      %530 = vmatprep.subr.mxu0 0.0
      %v531 = vand.u32 %v191, 4294901760
      %v532 = vsub.f32 %v191, %v531
      %v533 = vand.u32 %v532, 4294901760
      %534 = vmatpush1.msra.mxu0 %v533
      %535 = vmatprep.subr.mxu0 0.0
      %536 = vmatpush1.msra.mxu0 0.0
      %537 = vmatprep.subr.mxu0 0.0
      %538 = vmatpush1.msra.mxu0 0.0
      %539 = vmatprep.subr.mxu0 0.0
      %540 = vmatpush1.msra.mxu0 0.0
      %541 = vmatprep.subr.mxu0 0.0
      %542 = vmatpush1.msra.mxu0 0.0
      %543 = vmatprep.subr.mxu0 0.0
      %544 = vmatpush1.msra.mxu0 0.0
      %545 = vmatprep.subr.mxu0 0.0
      %546 = vmatpush1.msra.mxu0 0.0
      %547 = vmatprep.subr.mxu0 0.0
      %548 = vmatpush1.msra.mxu0 0.0
      %549 = vmatprep.subr.mxu0 0.0
      %550 = vmatpush1.msra.mxu0 0.0
      %551 = vmatprep.subr.mxu0 0.0
      %552 = vmatpush1.msra.mxu0 0.0
      %553 = vmatprep.subr.mxu0 0.0
      %554 = vmatpush1.msra.mxu0 0.0
      %555 = vmatprep.subr.mxu0 0.0
      %556 = vmatpush1.msra.mxu0 0.0
      %557 = vmatprep.subr.mxu0 0.0
      %558 = vmatpush1.msra.mxu0 0.0
      %559 = vmatprep.subr.mxu0 0.0
      %560 = vmatpush1.msra.mxu0 0.0
      %561 = vmatprep.subr.mxu0 0.0
      %562 = vmatpush1.msra.mxu0 0.0
      %563 = vmatprep.subr.mxu0 0.0
      %564 = vmatpush1.msra.mxu0 0.0
      %565 = vmatprep.subr.mxu0 0.0
      %566 = vmatpush1.msra.mxu0 0.0
      %567 = vmatprep.subr.mxu0 0.0
      %568 = vmatpush1.msra.mxu0 0.0
      %569 = vmatprep.subr.mxu0 0.0
      %570 = vmatpush1.msra.mxu0 0.0
      %571 = vmatprep.subr.mxu0 0.0
      %572 = vmatpush1.msra.mxu0 0.0
      %573 = vmatprep.subr.mxu0 0.0
      %574 = vmatpush1.msra.mxu0 0.0
      %575 = vmatprep.subr.mxu0 0.0
      %576 = vmatpush1.msra.mxu0 0.0
      %577 = vmatprep.subr.mxu0 0.0
      %578 = vmatpush1.msra.mxu0 0.0
      %579 = vmatprep.subr.mxu0 0.0
      %580 = vmatpush1.msra.mxu0 0.0
      %581 = vmatprep.subr.mxu0 0.0
      %582 = vmatpush1.msra.mxu0 0.0
      %583 = vmatprep.subr.mxu0 0.0
      %584 = vmatpush1.msra.mxu0 0.0
      %585 = vmatprep.subr.mxu0 0.0
      %586 = vmatpush1.msra.mxu0 0.0
      %587 = vmatprep.subr.mxu0 0.0
      %588 = vmatpush1.msra.mxu0 0.0
      %589 = vmatprep.subr.mxu0 0.0
      %590 = vmatpush1.msra.mxu0 0.0
      %591 = vmatprep.subr.mxu0 0.0
      %592 = vmatpush1.msra.mxu0 0.0
      %593 = vmatprep.subr.mxu0 0.0
      %594 = vmatpush1.msra.mxu0 0.0
      %595 = vmatprep.subr.mxu0 0.0
      %596 = vmatpush1.msra.mxu0 0.0
      %597 = vmatprep.mubr.f32.mxu0 0.0
      %v598 = vand.u32 %v194, 4294901760
      %599 = vmatmul.mubr.f32.gmra.mrb[0].mxu0 %v598
      %v600 = vpop.f32.mrb[0].mxu0
      %v601 = vadd.f32 %v519, %v600
      %v602 = vpop.f32.mrb[0].mxu0
      %603 = vmatprep.mubr.f32.mxu0 0.0
      %v604 = vand.u32 %v197, 4294901760
      %605 = vmatmul.mubr.f32.gmra.mrb[0].mxu0 %v604
      %v606 = vpop.f32.mrb[0].mxu0
      %v607 = vadd.f32 %v527, %v606
      %v608 = vpop.f32.mrb[0].mxu0
      %609 = vdwg.mxu0
      %610 = vmatprep.subr.mxu0 0.0
      %v611 = vand.u32 %v191, 4294901760
      %612 = vmatpush1.msra.mxu0 %v611
      %613 = vmatprep.subr.mxu0 0.0
      %614 = vmatpush1.msra.mxu0 0.0
      %615 = vmatprep.subr.mxu0 0.0
      %616 = vmatpush1.msra.mxu0 0.0
      %617 = vmatprep.subr.mxu0 0.0
      %618 = vmatpush1.msra.mxu0 0.0
      %619 = vmatprep.subr.mxu0 0.0
      %620 = vmatpush1.msra.mxu0 0.0
      %621 = vmatprep.subr.mxu0 0.0
      %622 = vmatpush1.msra.mxu0 0.0
      %623 = vmatprep.subr.mxu0 0.0
      %624 = vmatpush1.msra.mxu0 0.0
      %625 = vmatprep.subr.mxu0 0.0
      %626 = vmatpush1.msra.mxu0 0.0
      %627 = vmatprep.subr.mxu0 0.0
      %628 = vmatpush1.msra.mxu0 0.0
      %629 = vmatprep.subr.mxu0 0.0
      %630 = vmatpush1.msra.mxu0 0.0
      %631 = vmatprep.subr.mxu0 0.0
      %632 = vmatpush1.msra.mxu0 0.0
      %633 = vmatprep.subr.mxu0 0.0
      %634 = vmatpush1.msra.mxu0 0.0
      %635 = vmatprep.subr.mxu0 0.0
      %636 = vmatpush1.msra.mxu0 0.0
      %637 = vmatprep.subr.mxu0 0.0
      %638 = vmatpush1.msra.mxu0 0.0
      %639 = vmatprep.subr.mxu0 0.0
      %640 = vmatpush1.msra.mxu0 0.0
      %641 = vmatprep.subr.mxu0 0.0
      %642 = vmatpush1.msra.mxu0 0.0
      %643 = vmatprep.subr.mxu0 0.0
      %644 = vmatpush1.msra.mxu0 0.0
      %645 = vmatprep.subr.mxu0 0.0
      %646 = vmatpush1.msra.mxu0 0.0
      %647 = vmatprep.subr.mxu0 0.0
      %648 = vmatpush1.msra.mxu0 0.0
      %649 = vmatprep.subr.mxu0 0.0
      %650 = vmatpush1.msra.mxu0 0.0
      %651 = vmatprep.subr.mxu0 0.0
      %652 = vmatpush1.msra.mxu0 0.0
      %653 = vmatprep.subr.mxu0 0.0
      %654 = vmatpush1.msra.mxu0 0.0
      %655 = vmatprep.subr.mxu0 0.0
      %656 = vmatpush1.msra.mxu0 0.0
      %657 = vmatprep.subr.mxu0 0.0
      %658 = vmatpush1.msra.mxu0 0.0
      %659 = vmatprep.subr.mxu0 0.0
      %660 = vmatpush1.msra.mxu0 0.0
      %661 = vmatprep.subr.mxu0 0.0
      %662 = vmatpush1.msra.mxu0 0.0
      %663 = vmatprep.subr.mxu0 0.0
      %664 = vmatpush1.msra.mxu0 0.0
      %665 = vmatprep.subr.mxu0 0.0
      %666 = vmatpush1.msra.mxu0 0.0
      %667 = vmatprep.subr.mxu0 0.0
      %668 = vmatpush1.msra.mxu0 0.0
      %669 = vmatprep.subr.mxu0 0.0
      %670 = vmatpush1.msra.mxu0 0.0
      %671 = vmatprep.subr.mxu0 0.0
      %672 = vmatpush1.msra.mxu0 0.0
      %673 = vmatprep.subr.mxu0 0.0
      %674 = vmatpush1.msra.mxu0 0.0
      %675 = vmatprep.mubr.f32.mxu0 0.0
      %v676 = vand.u32 %v194, 4294901760
      %677 = vmatmul.mubr.f32.gmra.mrb[0].mxu0 %v676
      %v678 = vpop.f32.mrb[0].mxu0
      %v679 = vadd.f32 %v601, %v678
      %v680 = vpop.f32.mrb[0].mxu0
      %681 = vmatprep.mubr.f32.mxu0 0.0
      %v682 = vand.u32 %v197, 4294901760
      %683 = vmatmul.mubr.f32.gmra.mrb[0].mxu0 %v682
      %v684 = vpop.f32.mrb[0].mxu0
      %v685 = vadd.f32 %v607, %v684
      %v686 = vpop.f32.mrb[0].mxu0
      %687 = vdwg.mxu0
      %vm688 = vcmask 130048
      %v689 = vsel %vm688, %v679, inf
      %v690 = vsel %vm688, %v685, inf
      %v691 = vmin.f32 %v689, %v690
      %v692 = vrot.slane %v691, 4
      %v693 = vmin.f32 %v691, %v692
      %v694 = vrot.slane %v693, 2
      %v695 = vmin.f32 %v693, %v694
      %v696 = vrot.slane %v695, 1
      %v697 = vmin.f32 %v695, %v696
      %v698 = vsel %vm688, %v697, 0.0
      %699 = vadd.xlane.f32.xlu0 %v698
      %v700 = vpop.xlane.xlu0 %699
      %701 = vmin.xlane.f32.xlu0 %v689
      %v702 = vpop.xlane.xlu0 %701
      %703 = vmin.xlane.f32.xlu0 %v690
      %v704 = vpop.xlane.xlu0 %703
      %v705 = vld [vmem:[%s179] sm:$0x1]
      %v706 = vadd.f32 %v705, %v700
      %vm707 = vcmask 0
      %708 = vst.msk [vmem:[%s179] sm:$0x1] %vm707, %v706
      %v709 = vld [vmem:[#allocation2] sm:$0xff]
      %v710 = vld [vmem:[#allocation2 + $0x8] sm:$0xff]
      %v711 = vmin.f32 %v709, %v702
      %v712 = vmin.f32 %v710, %v704
      %vm713 = vcmask 7168
      %714 = vst.msk [vmem:[#allocation2] sm:$0xff] %vm713, %v711
      %715 = vst.msk [vmem:[#allocation2 + $0x8] sm:$0xff] %vm713, %v712
      // Predicated region
      $region33: #{chamfer_loss.1} parent=27 // pred_check
        %p716 = pneg %p180
      $region34: #{chamfer_loss.1} parent=27 // pred_check_branch
        %718 = sbr.rel (%p716) target = $region36
      $region35: #{chamfer_loss.1} parent=27 // pred_region
        %v719 = vld [vmem:[%s179] sm:$0x1]
        %v720 = vld [vmem:[#allocation2] sm:$0xff]
        %v721 = vld [vmem:[#allocation2 + $0x8] sm:$0xff]
        %v722 = vsel %vm713, %v720, 0.0
        %v723 = vsel %vm713, %v721, 0.0
        %v724 = vadd.f32 %v722, %v723
        %v725 = vrot.slane %v724, 4
        %v726 = vadd.f32 %v724, %v725
        %v727 = vrot.slane %v726, 2
        %v728 = vadd.f32 %v726, %v727
        %v729 = vrot.slane %v728, 1
        %v730 = vadd.f32 %v728, %v729
        %v731 = vadd.f32 %v719, %v730
        %732 = vst.msk [vmem:[%s179] sm:$0x1] %vm707, %v731
      $region36: #{chamfer_loss.1} parent=27 // pred_fallthru
        _
      %p733 = scmp.lt.s32.totalorder %s17, 1
      %s734 = scalar_select %p733, %s17, 1
      %s735 = scalar_lea.vmem %s2, %s734
      // Predicated region
      $region37: #{chamfer_loss.1} parent=27 // pred_check
        %p736 = pneg %p97
      $region38: #{chamfer_loss.1} parent=27 // pred_check_branch
        %738 = sbr.rel (%p736) target = $region40
      $region39: #{chamfer_loss.1} parent=27 // pred_region
        _
      $region40: #{chamfer_loss.1} parent=27 // pred_fallthru
        _
    $region28: #{chamfer_loss.1} parent=5 // pred_fallthru
      _
    %p739 = scmp.le.s32.totalorder 2, %s8
    // Predicated region
    $region41: #{chamfer_loss.1} parent=5 // pred_check
      %p740 = pneg %p739
    $region42: #{chamfer_loss.1} parent=5 // pred_check_branch
      %742 = sbr.rel (%p740) target = $region44
    $region43: #{chamfer_loss.1} parent=5 // pred_region
      %s743 = ssub.s32 %s8, 2
      // Predicated region
      $region45: #{chamfer_loss.1} parent=43 // pred_check
        %p744 = pneg %p103
      $region46: #{chamfer_loss.1} parent=43 // pred_check_branch
        %746 = sbr.rel (%p744) target = $region48
      $region47: #{chamfer_loss.1} parent=43 // pred_region
        %p747 = scmp.lt.s32.totalorder %s19, 1
        %s748 = scalar_select %p747, %s19, 1
        %s749 = scalar_lea.vmem %s2, %s748
      $region48: #{chamfer_loss.1} parent=43 // pred_fallthru
        _
    $region44: #{chamfer_loss.1} parent=5 // pred_fallthru
      _
  $region6: #{chamfer_loss.1} parent=0 // loop_footer
    %s12 = sadd.s32 1, %s8
  $region7: #{chamfer_loss.1} parent=0 // loop_footer_branch
    %7 = sbr.rel target = $region3
  $region8: #{chamfer_loss.1} parent=0 // loop_exit
    _

</llo_original>
